<compile_context>
chip_gen: v7x
topology: tpu7x:2x2x1
jax: 0.10.0
libtpu: 0.0.40
codegen_flags: <defaults>
</compile_context>

<pallas_src>
import math

import jax
import jax.numpy as jnp
from jax.experimental import pallas as pl
from jax.experimental.pallas import tpu as pltpu


def _round_up(x, m):
    return ((x + m - 1) // m) * m


def _masked_linear_kernel_nobias(x_ref, w_ref, m_ref, o_ref, acc_ref):
    k = pl.program_id(2)

    @pl.when(k == 0)
    def _():
        acc_ref[...] = jnp.zeros_like(acc_ref)

    # Mask multiply in f32 on the VPU, cast product to bf16 for the MXU.
    masked_w = (w_ref[...] * m_ref[...].astype(w_ref.dtype)).astype(jnp.bfloat16)
    acc_ref[...] += jnp.dot(
        x_ref[...].astype(jnp.bfloat16), masked_w,
        preferred_element_type=jnp.float32)

    @pl.when(k == pl.num_programs(2) - 1)
    def _():
        o_ref[...] = acc_ref[...].astype(o_ref.dtype)


def _masked_linear_kernel_bias(x_ref, w_ref, m_ref, b_ref, o_ref, acc_ref):
    k = pl.program_id(2)

    @pl.when(k == 0)
    def _():
        acc_ref[...] = jnp.zeros_like(acc_ref)

    masked_w = (w_ref[...] * m_ref[...].astype(w_ref.dtype)).astype(jnp.bfloat16)
    acc_ref[...] += jnp.dot(
        x_ref[...].astype(jnp.bfloat16), masked_w,
        preferred_element_type=jnp.float32)

    @pl.when(k == pl.num_programs(2) - 1)
    def _():
        # Bias add only in the epilogue (kept out of the inner K loop).
        o_ref[...] = (acc_ref[...] + b_ref[...]).astype(o_ref.dtype)


def masked_linear(x, weight, weight_mask, bias=None, *, tm=256, tn=256, tk=512):
    """y = x @ (weight * weight_mask).T + bias  via a tiled Pallas TPU kernel.

    x:           [batch, in_features]            (float32 or bfloat16)
    weight:      [out_features, in_features]     float32
    weight_mask: [out_features, in_features]     integer/bool 0-1 mask
    bias:        [out_features] or None
    """
    M, K = x.shape
    N, K2 = weight.shape
    assert K == K2, "in_features mismatch"
    out_dtype = x.dtype

    # Present weight/mask as [K, N] so the kernel contracts lhs last dim
    # against rhs first dim (no per-tile transposes on the rhs path).
    w_kn = weight.T
    m_kn = weight_mask.T.astype(jnp.int8)  # int8 mask stream: 4x fewer bytes vs f32

    # Clamp tile sizes to the (padded) problem; keep lane dims multiples of 128.
    tm = min(tm, _round_up(M, 8))
    tn = min(tn, _round_up(N, 128))
    tk = min(tk, _round_up(K, 128))
    Mp, Np, Kp = _round_up(M, tm), _round_up(N, tn), _round_up(K, tk)

    if (Mp, Kp) != (M, K):
        x = jnp.pad(x, ((0, Mp - M), (0, Kp - K)))
    if (Kp, Np) != (K, N):
        w_kn = jnp.pad(w_kn, ((0, Kp - K), (0, Np - N)))
        m_kn = jnp.pad(m_kn, ((0, Kp - K), (0, Np - N)))

    grid = (Mp // tm, Np // tn, Kp // tk)

    in_specs = [
        pl.BlockSpec((tm, tk), lambda i, j, k: (i, k)),   # x tile
        pl.BlockSpec((tk, tn), lambda i, j, k: (k, j)),   # weight [K,N] tile
        pl.BlockSpec((tk, tn), lambda i, j, k: (k, j)),   # int8 mask [K,N] tile
    ]
    args = [x, w_kn, m_kn]

    if bias is not None:
        b2d = bias.astype(out_dtype).reshape(1, N)
        if Np != N:
            b2d = jnp.pad(b2d, ((0, 0), (0, Np - N)))
        in_specs.append(pl.BlockSpec((1, tn), lambda i, j, k: (0, j)))
        args.append(b2d)
        kernel = _masked_linear_kernel_bias
    else:
        kernel = _masked_linear_kernel_nobias

    itemsize = jnp.dtype(x.dtype).itemsize
    cost = pl.CostEstimate(
        flops=2 * M * N * K,
        transcendentals=0,
        bytes_accessed=(M * K * itemsize                     # x
                        + N * K * jnp.dtype(weight.dtype).itemsize  # weight
                        + N * K * 1                          # int8 mask
                        + M * N * jnp.dtype(out_dtype).itemsize),   # out
    )

    out = pl.pallas_call(
        kernel,
        out_shape=jax.ShapeDtypeStruct((Mp, Np), out_dtype),
        grid_spec=pltpu.PrefetchScalarGridSpec(
            num_scalar_prefetch=0,
            grid=grid,
            in_specs=in_specs,
            out_specs=pl.BlockSpec((tm, tn), lambda i, j, k: (i, j)),
            scratch_shapes=[pltpu.VMEM((tm, tn), jnp.float32)],
        ),
        compiler_params=pltpu.CompilerParams(
            dimension_semantics=("parallel", "parallel", "arbitrary"),
        ),
        cost_estimate=cost,
    )(*args)

    if (Mp, Np) != (M, N):
        out = out[:M, :N]
    return out


def masked_linear_multi_step(x_seq, weight, weight_mask, bias=None, **tile_kw):
    """Multi-step mode: x_seq is [T, ..., in_features]; the time/batch dims are
    flattened into the matmul M dimension (same masked weights every step),
    which also raises effective M for better MXU utilization."""
    lead = x_seq.shape[:-1]
    K = x_seq.shape[-1]
    y2d = masked_linear(x_seq.reshape(-1, K), weight, weight_mask, bias, **tile_kw)
    return y2d.reshape(lead + (weight.shape[0],))


def init_masked_linear_params(key, in_features, out_features, bias=False,
                              init_sparsity=0.75, dtype=jnp.float32):
    """Parameter init mirroring MaskedLinearSynapseConn.reset_parameters().

    weight:      kaiming_uniform_(a=sqrt(5)) -> U(-1/sqrt(fan_in), 1/sqrt(fan_in))
    bias:        U(-1/sqrt(fan_in), 1/sqrt(fan_in)) if enabled
    weight_mask: 0/1 int mask with P(zero) ~= init_sparsity
                 (mimics init.sparse_ followed by (mask != 0).int()).
    """
    kw, kb, km = jax.random.split(key, 3)
    fan_in = in_features
    bound = 1.0 / math.sqrt(fan_in) if fan_in > 0 else 0.0
    weight = jax.random.uniform(
        kw, (out_features, in_features), dtype=dtype, minval=-bound, maxval=bound)
    b = None
    if bias:
        b = jax.random.uniform(
            kb, (out_features,), dtype=dtype, minval=-bound, maxval=bound)
    mask = jax.random.bernoulli(
        km, p=1.0 - init_sparsity, shape=(out_features, in_features)
    ).astype(jnp.int32)
    return weight, mask, b


if __name__ == "__main__":
    key = jax.random.PRNGKey(0)
    k1, k2, k3, k4 = jax.random.split(key, 4)

    # Case 1: module defaults (bias=False), batch=2, in=32, out=32.
    w, m, b = init_masked_linear_params(k1, 32, 32, bias=False, init_sparsity=0.75)
    x = jax.random.normal(k2, (2, 32), dtype=jnp.float32)
    y = jax.block_until_ready(masked_linear(x, w, m, b))
    y_ref = x @ (w * m.astype(w.dtype)).T
    assert y.shape == (2, 32)
    assert jnp.allclose(y, y_ref, atol=2e-2, rtol=2e-2), "case1 mismatch"

    # Case 2: bias=True, non-aligned shapes + multi-tile grid
    # (exercises padding, N parallel tiles and the K-reduction accumulator).
    w2, m2, b2 = init_masked_linear_params(k3, 200, 192, bias=True, init_sparsity=0.75)
    x2 = jax.random.normal(k4, (4, 200), dtype=jnp.float32)
    y2 = jax.block_until_ready(masked_linear(x2, w2, m2, b2, tm=8, tn=128, tk=128))
    y2_ref = x2 @ (w2 * m2.astype(w2.dtype)).T + b2
    assert y2.shape == (4, 192)
    assert jnp.allclose(y2, y2_ref, atol=2e-2, rtol=2e-2), "case2 mismatch"

    # Case 3: multi-step mode, x_seq = [T=3, batch=2, in=32].
    xs = jax.random.normal(k2, (3, 2, 32), dtype=jnp.float32)
    ys = jax.block_until_ready(masked_linear_multi_step(xs, w, m, b))
    ys_ref = xs @ (w * m.astype(w.dtype)).T
    assert ys.shape == (3, 2, 32)
    assert jnp.allclose(ys, ys_ref, atol=2e-2, rtol=2e-2), "case3 mismatch"

    print("KERNEL_OK")
</pallas_src>

<mosaic_0001>
module attributes {stable_mosaic.version = 11 : i64} {
  func.func @_masked_linear_kernel_nobias(%arg0: i32, %arg1: i32, %arg2: i32, %arg3: memref<8x128xf32, #tpu.memory_space<vmem>>, %arg4: memref<128x128xf32, #tpu.memory_space<vmem>>, %arg5: memref<128x128xi8, #tpu.memory_space<vmem>>, %arg6: memref<8x128xf32, #tpu.memory_space<vmem>>, %arg7: memref<8x128xf32, #tpu.memory_space<vmem>>) attributes {dimension_semantics = [#tpu.dimension_semantics<parallel>, #tpu.dimension_semantics<parallel>, #tpu.dimension_semantics<arbitrary>], iteration_bounds = array<i64: 1, 1, 1>, scalar_prefetch = 0 : i64, scratch_operands = 1 : i64, tpu.core_type = #tpu.core_type<tc>, window_params = [{transform_indices = @transform_0, window_bounds = array<i64: 8, 128>}, {transform_indices = @transform_1, window_bounds = array<i64: 128, 128>}, {transform_indices = @transform_2, window_bounds = array<i64: 128, 128>}, {transform_indices = @transform_3, window_bounds = array<i64: 8, 128>}]} {
    %c0_i32 = arith.constant 0 : i32
    %0 = arith.cmpi eq, %arg2, %c0_i32 : i32
    %1 = arith.extui %0 : i1 to i32
    %c0_i32_0 = arith.constant 0 : i32
    %2 = arith.cmpi ne, %1, %c0_i32_0 : i32
    scf.if %2 {
      %cst_12 = arith.constant 0.000000e+00 : f32
      %17 = vector.broadcast %cst_12 : f32 to vector<8x128xf32>
      %c0_13 = arith.constant 0 : index
      %c0_14 = arith.constant 0 : index
      %18 = vector.load %arg7[%c0_13, %c0_14] : memref<8x128xf32, #tpu.memory_space<vmem>>, vector<8x128xf32>
      tpu.vector_store %arg7[%c0_13, %c0_14], %17 {strides = array<i32>} : memref<8x128xf32, #tpu.memory_space<vmem>>, vector<8x128xf32>,
    } else {
    }
    %c0 = arith.constant 0 : index
    %c0_1 = arith.constant 0 : index
    %3 = vector.load %arg4[%c0, %c0_1] : memref<128x128xf32, #tpu.memory_space<vmem>>, vector<128x128xf32>
    %c0_2 = arith.constant 0 : index
    %c0_3 = arith.constant 0 : index
    %4 = vector.load %arg5[%c0_2, %c0_3] : memref<128x128xi8, #tpu.memory_space<vmem>>, vector<128x128xi8>
    %5 = arith.sitofp %4 : vector<128x128xi8> to vector<128x128xf32>
    %6 = arith.mulf %3, %5 : vector<128x128xf32>
    %7 = arith.truncf %6 : vector<128x128xf32> to vector<128x128xbf16>
    %c0_4 = arith.constant 0 : index
    %c0_5 = arith.constant 0 : index
    %8 = vector.load %arg7[%c0_4, %c0_5] : memref<8x128xf32, #tpu.memory_space<vmem>>, vector<8x128xf32>
    %c0_6 = arith.constant 0 : index
    %c0_7 = arith.constant 0 : index
    %9 = vector.load %arg3[%c0_6, %c0_7] : memref<8x128xf32, #tpu.memory_space<vmem>>, vector<8x128xf32>
    %10 = arith.truncf %9 : vector<8x128xf32> to vector<8x128xbf16>
    %cst = arith.constant dense<0.000000e+00> : vector<8x128xf32>
    %11 = tpu.matmul %10, %7, %cst {dimension_numbers = #tpu.dot_dimension_numbers<[1], [0], [0], [1], [0, 0, 1, 1], [], []>} : vector<8x128xbf16>, vector<128x128xbf16>, vector<8x128xf32> -> vector<8x128xf32>
    %12 = arith.addf %8, %11 : vector<8x128xf32>
    %c0_8 = arith.constant 0 : index
    %c0_9 = arith.constant 0 : index
    %13 = vector.load %arg7[%c0_8, %c0_9] : memref<8x128xf32, #tpu.memory_space<vmem>>, vector<8x128xf32>
    tpu.vector_store %arg7[%c0_8, %c0_9], %12 {strides = array<i32>} : memref<8x128xf32, #tpu.memory_space<vmem>>, vector<8x128xf32>,
    %c0_i32_10 = arith.constant 0 : i32
    %14 = arith.cmpi eq, %arg2, %c0_i32_10 : i32
    %15 = arith.extui %14 : i1 to i32
    %c0_i32_11 = arith.constant 0 : i32
    %16 = arith.cmpi ne, %15, %c0_i32_11 : i32
    scf.if %16 {
      %c0_12 = arith.constant 0 : index
      %c0_13 = arith.constant 0 : index
      %17 = vector.load %arg7[%c0_12, %c0_13] : memref<8x128xf32, #tpu.memory_space<vmem>>, vector<8x128xf32>
      %c0_14 = arith.constant 0 : index
      %c0_15 = arith.constant 0 : index
      %18 = vector.load %arg6[%c0_14, %c0_15] : memref<8x128xf32, #tpu.memory_space<vmem>>, vector<8x128xf32>
      tpu.vector_store %arg6[%c0_14, %c0_15], %17 {strides = array<i32>} : memref<8x128xf32, #tpu.memory_space<vmem>>, vector<8x128xf32>,
    } else {
    }
    return
  }
  func.func @transform_0(%arg0: i32, %arg1: i32, %arg2: i32) -> (i32, i32) {
    %c0_i32 = arith.constant 0 : i32
    return %arg0, %arg2 : i32, i32
  }
  func.func @transform_1(%arg0: i32, %arg1: i32, %arg2: i32) -> (i32, i32) {
    %c0_i32 = arith.constant 0 : i32
    return %arg2, %arg1 : i32, i32
  }
  func.func @transform_2(%arg0: i32, %arg1: i32, %arg2: i32) -> (i32, i32) {
    %c0_i32 = arith.constant 0 : i32
    return %arg2, %arg1 : i32, i32
  }
  func.func @transform_3(%arg0: i32, %arg1: i32, %arg2: i32) -> (i32, i32) {
    %c0_i32 = arith.constant 0 : i32
    return %arg0, %arg1 : i32, i32
  }
}

</mosaic_0001>

<llo_original>
// kernel: tpu_custom_call.1
$region0: #{tpu_custom_call.1}
  #allocation0 [shape = 'u32[]', space=smem, size = 0x4, offset = 0x4, fixed_abs, tag = 'smem constant byte address 0x4 - core index']
  #allocation1 [shape = 'u32[144,128]{1,0:T(1,128)}', space=vmem, size = 0x12000, scoped, tag = 'internal scratch']
  #allocation2 [shape = 'f32[8,128]{1,0:T(8,128)}', space=vmem, size = 0x1000, scoped, tag = 'scratch operand']
  %s0 = inlined_call_operand.hbm [shape: f32[8,128], index: 0, kind: input, shape index: {}]
  %s1 = inlined_call_operand.hbm [shape: f32[128,128], index: 1, kind: input, shape index: {}]
  %s2 = inlined_call_operand.hbm [shape: s8[128,128], index: 2, kind: input, shape index: {}]
  %s3 = inlined_call_operand.hbm [shape: f32[8,128], index: 3, kind: output, shape index: {}]
  %s4 = sld [smem:[#allocation0]]
  $region42: #{tpu_custom_call.1} parent=0
    _
  %s6 = ssub.s32 1, %s4
  %s7 = scalar_select 0, %s6, %s4
  $region1: #{tpu_custom_call.1} parent=0
    #allocation3 [shape = 'u8[4096]{0}', space=vmem, size = 0x1000, scoped, tag = 'input window, operand 0, single buffered']
    #allocation4 [shape = 's32[1]{0}', space=sflag, size = 0x4, scoped, tag = 'scoped memory for tpu_custom_call.1']
    #allocation5 [shape = 's32[1]{0}', space=sflag, size = 0x4, scoped, tag = 'scoped memory for tpu_custom_call.1']
    #allocation6 [shape = 'u8[65536]{0}', space=vmem, size = 0x10000, scoped, tag = 'input window, operand 1, single buffered']
    #allocation7 [shape = 's32[1]{0}', space=sflag, size = 0x4, scoped, tag = 'scoped memory for tpu_custom_call.1']
    #allocation8 [shape = 'u8[16384]{0}', space=vmem, size = 0x4000, scoped, tag = 'input window, operand 2, single buffered']
    #allocation9 [shape = 'u8[4096]{0}', space=vmem, size = 0x1000, scoped, tag = 'output window, operand 0, single buffered']
    %8 = vsyncpa [#allocation4], 0
    %9 = vsyncpa [#allocation7], 0
    %10 = vsyncpa [#allocation5], 0
    // Predicated region
    $region2: #{tpu_custom_call.1} parent=1 // pred_check
      _
    $region3: #{tpu_custom_call.1} parent=1 // pred_check_branch
      %12 = sbr.rel (0) target = $region5
    $region4: #{tpu_custom_call.1} parent=1 // pred_region
      %s14 = ssub.s32 128, 128
      %15 = vsyncadd [#allocation4], %s14
      %s17 = sshll.u32 [#allocation3], 4
      %s18 = int_to_ptr.vmem [resolvable:$true] %s17
      %20 = dma.hbm_to_vmem [thread:$0]  %s0, 128, %s18, [#allocation4]
    $region5: #{tpu_custom_call.1} parent=1 // pred_fallthru
      _
    // Predicated region
    $region6: #{tpu_custom_call.1} parent=1 // pred_check
      _
    $region7: #{tpu_custom_call.1} parent=1 // pred_check_branch
      %22 = sbr.rel (0) target = $region9
    $region8: #{tpu_custom_call.1} parent=1 // pred_region
      %s24 = ssub.s32 2048, 2048
      %25 = vsyncadd [#allocation7], %s24
      %s26 = sshll.u32 [#allocation6], 4
      %s27 = int_to_ptr.vmem [resolvable:$true] %s26
      %32 = dma.hbm_to_vmem [thread:$0]  %s1, 2048, %s27, [#allocation7], 128, 128, 8
    $region9: #{tpu_custom_call.1} parent=1 // pred_fallthru
      _
    // Predicated region
    $region10: #{tpu_custom_call.1} parent=1 // pred_check
      _
    $region11: #{tpu_custom_call.1} parent=1 // pred_check_branch
      %34 = sbr.rel (0) target = $region13
    $region12: #{tpu_custom_call.1} parent=1 // pred_region
      %s36 = ssub.s32 512, 512
      %37 = vsyncadd [#allocation7], %s36
      %s38 = sshll.u32 [#allocation8], 4
      %s39 = int_to_ptr.vmem [resolvable:$true] %s38
      %44 = dma.hbm_to_vmem [thread:$0]  %s2, 512, %s39, [#allocation7], 128, 128, 8
    $region13: #{tpu_custom_call.1} parent=1 // pred_fallthru
      _
    // Predicated region
    $region14: #{tpu_custom_call.1} parent=1 // pred_check
      _
    $region15: #{tpu_custom_call.1} parent=1 // pred_check_branch
      %46 = sbr.rel (0) target = $region17
    $region16: #{tpu_custom_call.1} parent=1 // pred_region
      %47 = dma.done [#allocation4], 128
    $region17: #{tpu_custom_call.1} parent=1 // pred_fallthru
      _
    // Predicated region
    $region18: #{tpu_custom_call.1} parent=1 // pred_check
      _
    $region19: #{tpu_custom_call.1} parent=1 // pred_check_branch
      %49 = sbr.rel (0) target = $region21
    $region20: #{tpu_custom_call.1} parent=1 // pred_region
      %50 = dma.done [#allocation7], 2048
    $region21: #{tpu_custom_call.1} parent=1 // pred_fallthru
      _
    // Predicated region
    $region22: #{tpu_custom_call.1} parent=1 // pred_check
      _
    $region23: #{tpu_custom_call.1} parent=1 // pred_check_branch
      %52 = sbr.rel (0) target = $region25
    $region24: #{tpu_custom_call.1} parent=1 // pred_region
      %53 = dma.done [#allocation7], 512
    $region25: #{tpu_custom_call.1} parent=1 // pred_fallthru
      _
    %p55 = scmp.eq.s32.totalorder 0, 0
    // Predicated region
    $region26: #{tpu_custom_call.1} parent=1 // pred_check
      %p56 = pneg %p55
    $region27: #{tpu_custom_call.1} parent=1 // pred_check_branch
      %58 = sbr.rel (%p56) target = $region29
    $region28: #{tpu_custom_call.1} parent=1 // pred_region
      %59 = vst [vmem:[#allocation2] sm:$0xff] 0.0
    $region29: #{tpu_custom_call.1} parent=1 // pred_fallthru
      _
    %v60 = vld [vmem:[#allocation6] sm:$0xff]
    %v61 = vld [vmem:[#allocation6 + $0x8] sm:$0xff]
    %v62 = vld [vmem:[#allocation6 + $0x10] sm:$0xff]
    %v63 = vld [vmem:[#allocation6 + $0x18] sm:$0xff]
    %v64 = vld [vmem:[#allocation6 + $0x20] sm:$0xff]
    %v65 = vld [vmem:[#allocation6 + $0x28] sm:$0xff]
    %v66 = vld [vmem:[#allocation6 + $0x30] sm:$0xff]
    %v67 = vld [vmem:[#allocation6 + $0x38] sm:$0xff]
    %v68 = vld [vmem:[#allocation6 + $0x40] sm:$0xff]
    %v69 = vld [vmem:[#allocation6 + $0x48] sm:$0xff]
    %v70 = vld [vmem:[#allocation6 + $0x50] sm:$0xff]
    %v71 = vld [vmem:[#allocation6 + $0x58] sm:$0xff]
    %v72 = vld [vmem:[#allocation6 + $0x60] sm:$0xff]
    %v73 = vld [vmem:[#allocation6 + $0x68] sm:$0xff]
    %v74 = vld [vmem:[#allocation6 + $0x70] sm:$0xff]
    %v75 = vld [vmem:[#allocation6 + $0x78] sm:$0xff]
    %v76 = vld [vmem:[#allocation8] sm:$0xff]
    %v77 = vld [vmem:[#allocation8 + $0x8] sm:$0xff]
    %v78 = vld [vmem:[#allocation8 + $0x10] sm:$0xff]
    %v79 = vld [vmem:[#allocation8 + $0x18] sm:$0xff]
    %v80 = vunpack.c.0.s8 %v76
    %v81 = vunpack.c.1.s8 %v76
    %v82 = vunpack.c.2.s8 %v76
    %v83 = vunpack.c.3.s8 %v76
    %v84 = vunpack.c.0.s8 %v77
    %v85 = vunpack.c.1.s8 %v77
    %v86 = vunpack.c.2.s8 %v77
    %v87 = vunpack.c.3.s8 %v77
    %v88 = vunpack.c.0.s8 %v78
    %v89 = vunpack.c.1.s8 %v78
    %v90 = vunpack.c.2.s8 %v78
    %v91 = vunpack.c.3.s8 %v78
    %v92 = vunpack.c.0.s8 %v79
    %v93 = vunpack.c.1.s8 %v79
    %v94 = vunpack.c.2.s8 %v79
    %v95 = vunpack.c.3.s8 %v79
    %v96 = vcvt.s32.f32 %v80
    %v97 = vcvt.s32.f32 %v81
    %v98 = vcvt.s32.f32 %v82
    %v99 = vcvt.s32.f32 %v83
    %v100 = vcvt.s32.f32 %v84
    %v101 = vcvt.s32.f32 %v85
    %v102 = vcvt.s32.f32 %v86
    %v103 = vcvt.s32.f32 %v87
    %v104 = vcvt.s32.f32 %v88
    %v105 = vcvt.s32.f32 %v89
    %v106 = vcvt.s32.f32 %v90
    %v107 = vcvt.s32.f32 %v91
    %v108 = vcvt.s32.f32 %v92
    %v109 = vcvt.s32.f32 %v93
    %v110 = vcvt.s32.f32 %v94
    %v111 = vcvt.s32.f32 %v95
    %v112 = vmul.f32 %v60, %v96
    %v113 = vmul.f32 %v61, %v97
    %v114 = vmul.f32 %v62, %v98
    %v115 = vmul.f32 %v63, %v99
    %v116 = vmul.f32 %v64, %v100
    %v117 = vmul.f32 %v65, %v101
    %v118 = vmul.f32 %v66, %v102
    %v119 = vmul.f32 %v67, %v103
    %v120 = vmul.f32 %v68, %v104
    %v121 = vmul.f32 %v69, %v105
    %v122 = vmul.f32 %v70, %v106
    %v123 = vmul.f32 %v71, %v107
    %v124 = vmul.f32 %v72, %v108
    %v125 = vmul.f32 %v73, %v109
    %v126 = vmul.f32 %v74, %v110
    %v127 = vmul.f32 %v75, %v111
    %v128 = vpack.c.bf16 %v113, %v112
    %v129 = vpack.c.bf16 %v115, %v114
    %v130 = vpack.c.bf16 %v117, %v116
    %v131 = vpack.c.bf16 %v119, %v118
    %v132 = vpack.c.bf16 %v121, %v120
    %v133 = vpack.c.bf16 %v123, %v122
    %v134 = vpack.c.bf16 %v125, %v124
    %v135 = vpack.c.bf16 %v127, %v126
    %v136 = vld [vmem:[#allocation2] sm:$0xff]
    %v137 = vld [vmem:[#allocation3] sm:$0xff]
    %v138 = vpack.c.bf16 %v137, %v137
    %139 = vmatprep.subr.bf16.mxu0 0
    %140 = vmatpush1.bf16.msra.mxu0 %v128
    %141 = vmatprep.subr.bf16.mxu0 0
    %142 = vmatpush1.bf16.msra.mxu0 %v129
    %143 = vmatprep.subr.bf16.mxu0 0
    %144 = vmatpush1.bf16.msra.mxu0 %v130
    %145 = vmatprep.subr.bf16.mxu0 0
    %146 = vmatpush1.bf16.msra.mxu0 %v131
    %147 = vmatprep.subr.bf16.mxu0 0
    %148 = vmatpush1.bf16.msra.mxu0 %v132
    %149 = vmatprep.subr.bf16.mxu0 0
    %150 = vmatpush1.bf16.msra.mxu0 %v133
    %151 = vmatprep.subr.bf16.mxu0 0
    %152 = vmatpush1.bf16.msra.mxu0 %v134
    %153 = vmatprep.subr.bf16.mxu0 0
    %154 = vmatpush1.bf16.msra.mxu0 %v135
    %155 = vmatprep.subr.bf16.mxu0 0
    %156 = vmatpush1.bf16.msra.mxu0 0
    %157 = vmatprep.subr.bf16.mxu0 0
    %158 = vmatpush1.bf16.msra.mxu0 0
    %159 = vmatprep.subr.bf16.mxu0 0
    %160 = vmatpush1.bf16.msra.mxu0 0
    %161 = vmatprep.subr.bf16.mxu0 0
    %162 = vmatpush1.bf16.msra.mxu0 0
    %163 = vmatprep.subr.bf16.mxu0 0
    %164 = vmatpush1.bf16.msra.mxu0 0
    %165 = vmatprep.subr.bf16.mxu0 0
    %166 = vmatpush1.bf16.msra.mxu0 0
    %167 = vmatprep.subr.bf16.mxu0 0
    %168 = vmatpush1.bf16.msra.mxu0 0
    %169 = vmatprep.subr.bf16.mxu0 0
    %170 = vmatpush1.bf16.msra.mxu0 0
    %171 = vmatprep.mubr.bf16.mxu0 0
    %172 = vmatmul.mubr.bf16.gmra.mrb[0].mxu0 %v138
    %v173 = vpop.f32.mrb[0].mxu0
    %v174 = vadd.f32 0.0, %v173
    %v175 = vpop.f32.mrb[0].mxu0
    %v176 = vpop.f32.mrb[0].mxu0
    %v177 = vpop.f32.mrb[0].mxu0
    %178 = vdwg.mxu0
    %v179 = vadd.f32 %v136, %v174
    %180 = vst [vmem:[#allocation2] sm:$0xff] %v179
    // Predicated region
    $region30: #{tpu_custom_call.1} parent=1 // pred_check
      %p181 = pneg %p55
    $region31: #{tpu_custom_call.1} parent=1 // pred_check_branch
      %183 = sbr.rel (%p181) target = $region33
    $region32: #{tpu_custom_call.1} parent=1 // pred_region
      %v184 = vld [vmem:[#allocation2] sm:$0xff]
      %185 = vst [vmem:[#allocation9] sm:$0xff] %v184
    $region33: #{tpu_custom_call.1} parent=1 // pred_fallthru
      _
    // Predicated region
    $region34: #{tpu_custom_call.1} parent=1 // pred_check
      _
    $region35: #{tpu_custom_call.1} parent=1 // pred_check_branch
      %187 = sbr.rel (0) target = $region37
    $region36: #{tpu_custom_call.1} parent=1 // pred_region
      %s189 = ssub.s32 128, 128
      %190 = vsyncadd [#allocation5], %s189
      %s192 = sshll.u32 [#allocation9], 4
      %s193 = int_to_ptr.vmem [resolvable:$true] %s192
      %195 = dma.vmem_to_hbm [thread:$0]  %s193, 128, %s3, [#allocation5]
    $region37: #{tpu_custom_call.1} parent=1 // pred_fallthru
      _
    // Predicated region
    $region38: #{tpu_custom_call.1} parent=1 // pred_check
      _
    $region39: #{tpu_custom_call.1} parent=1 // pred_check_branch
      %197 = sbr.rel (0) target = $region41
    $region40: #{tpu_custom_call.1} parent=1 // pred_region
      %198 = dma.done [#allocation5], 128
    $region41: #{tpu_custom_call.1} parent=1 // pred_fallthru
      _
    %199 = vsyncpa [#allocation4], 1
    %200 = vsyncpa [#allocation7], 1
    %201 = vsyncpa [#allocation5], 1

</llo_original>
